<compile_context>
chip_gen: v6e
topology: v6e:2x2x1
jax: 0.10.0
libtpu: 0.0.40
codegen_flags: <defaults>
</compile_context>

<pallas_src>
import math

import jax
import jax.numpy as jnp
from jax import lax
from jax.experimental import pallas as pl
from jax.experimental.pallas import tpu as pltpu


def _round_up(x: int, m: int) -> int:
    return ((x + m - 1) // m) * m


def _cdiv(a: int, b: int) -> int:
    return -(-a // b)


def _pick_tile(dim: int, cap: int, align: int) -> int:
    """Tile size (multiple of `align`, <= ~cap) minimizing padding of `dim`."""
    d = _round_up(max(dim, 1), align)
    if d <= cap:
        return d
    n_tiles = _cdiv(d, cap)
    return _round_up(_cdiv(d, n_tiles), align)


def _sublane_align(dtype) -> int:
    return {4: 8, 2: 16, 1: 32}.get(jnp.dtype(dtype).itemsize, 8)


# ---------------------------------------------------------------------------
# Kernels
# ---------------------------------------------------------------------------

def _linear_kernel_direct(x_ref, w_ref, b_ref, o_ref):
    """f32 output: accumulate straight into the (VMEM-resident) output block."""
    k = pl.program_id(2)

    @pl.when(k == 0)
    def _():
        o_ref[...] = jnp.zeros_like(o_ref)

    # y[m, n] += sum_k x[m, k] * w[n, k]   (untransposed torch-style weight)
    o_ref[...] += lax.dot_general(
        x_ref[...],
        w_ref[...],
        dimension_numbers=(((1,), (1,)), ((), ())),
        preferred_element_type=jnp.float32,
    )

    @pl.when(k == pl.num_programs(2) - 1)
    def _():
        o_ref[...] += b_ref[...]          # (1, tn) broadcast over (tm, tn)


def _linear_kernel_acc(x_ref, w_ref, b_ref, o_ref, acc_ref):
    """Narrow output dtype: f32 VMEM accumulator, cast on the last K step."""
    k = pl.program_id(2)

    @pl.when(k == 0)
    def _():
        acc_ref[...] = jnp.zeros_like(acc_ref)

    acc_ref[...] += lax.dot_general(
        x_ref[...],
        w_ref[...],
        dimension_numbers=(((1,), (1,)), ((), ())),
        preferred_element_type=jnp.float32,
    )

    @pl.when(k == pl.num_programs(2) - 1)
    def _():
        o_ref[...] = (acc_ref[...] + b_ref[...]).astype(o_ref.dtype)


# ---------------------------------------------------------------------------
# Module: one-time parameter prep + jitted forward
# ---------------------------------------------------------------------------

def make_linear(weight, bias, *, tm_cap: int = 512, tn_cap: int = 1024,
                tk_cap: int = 1024):
    """weight: (N, K) torch-style; bias: (N,). Returns forward(x) -> {'x': ...}."""
    N, K = weight.shape
    assert bias.shape == (N,)

    tk = _pick_tile(K, tk_cap, 128)
    tn = _pick_tile(N, tn_cap, 128)
    N_p = _round_up(N, tn)
    K_p = _round_up(K, tk)

    # v7x megacore: if only one j block exists and N is wide enough, split it so
    # both TensorCores get work even when M fits in a single i block.
    if N_p // tn == 1 and N_p >= 256:
        tn = _round_up(N_p // 2, 128)
        N_p = _round_up(N, tn)

    # One-time parameter padding (hoisted out of the per-call / jitted path).
    w_p = jnp.pad(weight, ((0, N_p - N), (0, K_p - K)))                 # (N_p, K_p)
    b_p = jnp.pad(bias.astype(jnp.float32), (0, N_p - N)).reshape(1, N_p)
    w_itemsize = jnp.dtype(w_p.dtype).itemsize

    @jax.jit
    def forward(x):
        assert x.shape[-1] == K, f"expected last dim {K}, got {x.shape[-1]}"
        lead_shape = x.shape[:-1]
        M = math.prod(lead_shape) if lead_shape else 1

        if M == 0:
            return {"x": jnp.zeros((*lead_shape, N), dtype=x.dtype)}

        x2 = x.reshape(M, K)
        itemsize = jnp.dtype(x.dtype).itemsize

        tm = _pick_tile(M, tm_cap, _sublane_align(x.dtype))
        M_p = _round_up(M, tm)

        x_p = x2
        if M_p != M or K_p != K:
            x_p = jnp.pad(x2, ((0, M_p - M), (0, K_p - K)))

        grid = (M_p // tm, N_p // tn, K_p // tk)

        # f32 outputs accumulate directly into the output block (no scratch).
        direct = jnp.dtype(x.dtype) == jnp.dtype(jnp.float32)
        kernel = _linear_kernel_direct if direct else _linear_kernel_acc
        scratch = [] if direct else [pltpu.VMEM((tm, tn), jnp.float32)]

        # VMEM footprint (double-buffered inputs + output) -> explicit limit,
        # capped below v7x's 64 MiB per-core physical VMEM.
        footprint = (2 * tm * tk * itemsize          # x tiles
                     + 2 * tn * tk * w_itemsize      # W tiles
                     + 2 * tm * tn * itemsize        # output tiles
                     + 2 * tn * 4)                   # bias tiles
        if not direct:
            footprint += tm * tn * 4
        vmem_limit = int(min(48 << 20, max(32 << 20, 2 * footprint)))

        # Re-streaming-aware byte count: x is read once per j pass, W once per
        # i pass; output written once.
        cost = pl.CostEstimate(
            flops=2 * M_p * N_p * K_p,
            transcendentals=0,
            bytes_accessed=((N_p // tn) * M_p * K_p * itemsize
                            + (M_p // tm) * N_p * K_p * w_itemsize
                            + M_p * N_p * itemsize
                            + (M_p // tm) * N_p * 4),
        )

        out = pl.pallas_call(
            kernel,
            out_shape=jax.ShapeDtypeStruct((M_p, N_p), x.dtype),
            grid_spec=pltpu.PrefetchScalarGridSpec(
                num_scalar_prefetch=0,
                grid=grid,
                in_specs=[
                    pl.BlockSpec((tm, tk), lambda i, j, k: (i, k)),   # x tile
                    pl.BlockSpec((tn, tk), lambda i, j, k: (j, k)),   # W tile (N, K)
                    pl.BlockSpec((1, tn), lambda i, j, k: (0, j)),    # bias tile
                ],
                out_specs=pl.BlockSpec((tm, tn), lambda i, j, k: (i, j)),
                scratch_shapes=scratch,
            ),
            compiler_params=pltpu.CompilerParams(
                dimension_semantics=("parallel", "parallel", "arbitrary"),
                vmem_limit_bytes=vmem_limit,
            ),
            cost_estimate=cost,
        )(x_p, w_p, b_p)

        y = out[:M, :N] if (M_p != M or N_p != N) else out
        return {"x": y.reshape(*lead_shape, N)}

    return forward


if __name__ == "__main__":
    # Module constructed as Linear(in_features=32, out_features=64)
    in_features, out_features = 32, 64
    batch, seq = 2, 8

    key = jax.random.PRNGKey(0)
    kx, kw, kb = jax.random.split(key, 3)

    # Deterministic synthetic parameters (torch nn.Linear shapes: W (out,in), b (out,))
    bound = 1.0 / (in_features ** 0.5)
    weight = jax.random.uniform(kw, (out_features, in_features),
                                dtype=jnp.float32, minval=-bound, maxval=bound)
    bias = jax.random.uniform(kb, (out_features,),
                              dtype=jnp.float32, minval=-bound, maxval=bound)

    x = jax.random.normal(kx, (batch, seq, in_features), dtype=jnp.float32)

    linear = make_linear(weight, bias)   # one-time param padding / layout here
    out = linear(x)
    jax.block_until_ready(out["x"])

    # Sanity check against plain-JAX reference
    ref = x @ weight.T + bias
    assert out["x"].shape == (batch, seq, out_features)
    assert jnp.allclose(out["x"], ref, atol=1e-5, rtol=1e-5)

    print("KERNEL_OK")
</pallas_src>

<mosaic_0001>
module attributes {stable_mosaic.version = 11 : i64} {
  func.func @_linear_kernel_direct(%arg0: i32, %arg1: i32, %arg2: i32, %arg3: memref<16x128xf32, #tpu.memory_space<vmem>>, %arg4: memref<128x128xf32, #tpu.memory_space<vmem>>, %arg5: memref<1x128xf32, #tpu.memory_space<vmem>>, %arg6: memref<16x128xf32, #tpu.memory_space<vmem>>) attributes {dimension_semantics = [#tpu.dimension_semantics<parallel>, #tpu.dimension_semantics<parallel>, #tpu.dimension_semantics<arbitrary>], iteration_bounds = array<i64: 1, 1, 1>, scalar_prefetch = 0 : i64, scratch_operands = 0 : i64, tpu.core_type = #tpu.core_type<tc>, window_params = [{transform_indices = @transform_0, window_bounds = array<i64: 16, 128>}, {transform_indices = @transform_1, window_bounds = array<i64: 128, 128>}, {transform_indices = @transform_2, window_bounds = array<i64: 1, 128>}, {transform_indices = @transform_3, window_bounds = array<i64: 16, 128>}]} {
    %c0_i32 = arith.constant 0 : i32
    %0 = arith.cmpi eq, %arg2, %c0_i32 : i32
    %1 = arith.extui %0 : i1 to i32
    %c0_i32_0 = arith.constant 0 : i32
    %2 = arith.cmpi ne, %1, %c0_i32_0 : i32
    scf.if %2 {
      %cst_10 = arith.constant 0.000000e+00 : f32
      %12 = vector.broadcast %cst_10 : f32 to vector<16x128xf32>
      %c0_11 = arith.constant 0 : index
      %c0_12 = arith.constant 0 : index
      %13 = vector.load %arg6[%c0_11, %c0_12] : memref<16x128xf32, #tpu.memory_space<vmem>>, vector<16x128xf32>
      tpu.vector_store %arg6[%c0_11, %c0_12], %12 {strides = array<i32>} : memref<16x128xf32, #tpu.memory_space<vmem>>, vector<16x128xf32>,
    } else {
    }
    %c0 = arith.constant 0 : index
    %c0_1 = arith.constant 0 : index
    %3 = vector.load %arg6[%c0, %c0_1] : memref<16x128xf32, #tpu.memory_space<vmem>>, vector<16x128xf32>
    %c0_2 = arith.constant 0 : index
    %c0_3 = arith.constant 0 : index
    %4 = vector.load %arg3[%c0_2, %c0_3] : memref<16x128xf32, #tpu.memory_space<vmem>>, vector<16x128xf32>
    %c0_4 = arith.constant 0 : index
    %c0_5 = arith.constant 0 : index
    %5 = vector.load %arg4[%c0_4, %c0_5] : memref<128x128xf32, #tpu.memory_space<vmem>>, vector<128x128xf32>
    %cst = arith.constant dense<0.000000e+00> : vector<16x128xf32>
    %6 = tpu.matmul %4, %5, %cst {dimension_numbers = #tpu.dot_dimension_numbers<[1], [1], [0], [0], [0, 0, 1, 0], [], []>} : vector<16x128xf32>, vector<128x128xf32>, vector<16x128xf32> -> vector<16x128xf32>
    %7 = arith.addf %3, %6 : vector<16x128xf32>
    %c0_6 = arith.constant 0 : index
    %c0_7 = arith.constant 0 : index
    %8 = vector.load %arg6[%c0_6, %c0_7] : memref<16x128xf32, #tpu.memory_space<vmem>>, vector<16x128xf32>
    tpu.vector_store %arg6[%c0_6, %c0_7], %7 {strides = array<i32>} : memref<16x128xf32, #tpu.memory_space<vmem>>, vector<16x128xf32>,
    %c0_i32_8 = arith.constant 0 : i32
    %9 = arith.cmpi eq, %arg2, %c0_i32_8 : i32
    %10 = arith.extui %9 : i1 to i32
    %c0_i32_9 = arith.constant 0 : i32
    %11 = arith.cmpi ne, %10, %c0_i32_9 : i32
    scf.if %11 {
      %c0_10 = arith.constant 0 : index
      %c0_11 = arith.constant 0 : index
      %12 = vector.load %arg6[%c0_10, %c0_11] : memref<16x128xf32, #tpu.memory_space<vmem>>, vector<16x128xf32>
      %c0_12 = arith.constant 0 : index
      %c0_13 = arith.constant 0 : index
      %13 = vector.load %arg5[%c0_12, %c0_13] : memref<1x128xf32, #tpu.memory_space<vmem>>, vector<1x128xf32>
      %14 = vector.broadcast %13 : vector<1x128xf32> to vector<16x128xf32>
      %15 = arith.addf %12, %14 : vector<16x128xf32>
      %c0_14 = arith.constant 0 : index
      %c0_15 = arith.constant 0 : index
      %16 = vector.load %arg6[%c0_14, %c0_15] : memref<16x128xf32, #tpu.memory_space<vmem>>, vector<16x128xf32>
      tpu.vector_store %arg6[%c0_14, %c0_15], %15 {strides = array<i32>} : memref<16x128xf32, #tpu.memory_space<vmem>>, vector<16x128xf32>,
    } else {
    }
    return
  }
  func.func @transform_0(%arg0: i32, %arg1: i32, %arg2: i32) -> (i32, i32) {
    %c0_i32 = arith.constant 0 : i32
    return %arg0, %arg2 : i32, i32
  }
  func.func @transform_1(%arg0: i32, %arg1: i32, %arg2: i32) -> (i32, i32) {
    %c0_i32 = arith.constant 0 : i32
    return %arg1, %arg2 : i32, i32
  }
  func.func @transform_2(%arg0: i32, %arg1: i32, %arg2: i32) -> (i32, i32) {
    %c0_i32 = arith.constant 0 : i32
    %c0_i32_0 = arith.constant 0 : i32
    return %c0_i32, %arg1 : i32, i32
  }
  func.func @transform_3(%arg0: i32, %arg1: i32, %arg2: i32) -> (i32, i32) {
    %c0_i32 = arith.constant 0 : i32
    return %arg0, %arg1 : i32, i32
  }
}

</mosaic_0001>

<llo_original>
// kernel: forward.1
$region0: #{forward.1}
  #allocation0 [shape = 'u32[]', space=smem, size = 0x4, offset = 0x4, fixed_abs, tag = 'smem constant byte address 0x4 - core index']
  #allocation1 [shape = 'u32[144,128]{1,0:T(1,128)}', space=vmem, size = 0x12000, scoped, tag = 'internal scratch']
  %s0 = inlined_call_operand.vmem [shape: f32[16,128], index: 0, kind: input, shape index: {}]
  %s1 = inlined_call_operand.hbm [shape: f32[128,128], index: 1, kind: input, shape index: {}]
  %s2 = inlined_call_operand.vmem [shape: f32[1,128], index: 2, kind: input, shape index: {}]
  %s3 = inlined_call_operand.vmem [shape: f32[16,128], index: 3, kind: output, shape index: {}]
  %s4 = sld [smem:[#allocation0]]
  $region34: #{forward.1} parent=0
    _
  %s6 = ssub.s32 1, %s4
  %s7 = scalar_select 0, %s6, %s4
  $region1: #{forward.1} parent=0
    #allocation2 [shape = 'u8[65536]{0}', space=vmem, size = 0x10000, scoped, tag = 'input window, operand 1, single buffered']
    #allocation3 [shape = 's32[1]{0}', space=sflag, size = 0x4, scoped, tag = 'scoped memory for forward.1']
    %8 = vsyncpa [#allocation3], 0
    // Predicated region
    $region2: #{forward.1} parent=1 // pred_check
      _
    $region3: #{forward.1} parent=1 // pred_check_branch
      %10 = sbr.rel (0) target = $region5
    $region4: #{forward.1} parent=1 // pred_region
      _
    $region5: #{forward.1} parent=1 // pred_fallthru
      _
    // Predicated region
    $region6: #{forward.1} parent=1 // pred_check
      _
    $region7: #{forward.1} parent=1 // pred_check_branch
      %12 = sbr.rel (0) target = $region9
    $region8: #{forward.1} parent=1 // pred_region
      %s14 = ssub.s32 2048, 2048
      %15 = vsyncadd [#allocation3], %s14
      %s16 = sshll.u32 [#allocation2], 4
      %s17 = int_to_ptr.vmem [resolvable:$true] %s16
      %22 = dma.hbm_to_vmem [thread:$0]  %s1, 2048, %s17, [#allocation3], 128, 128, 8
    $region9: #{forward.1} parent=1 // pred_fallthru
      _
    // Predicated region
    $region10: #{forward.1} parent=1 // pred_check
      _
    $region11: #{forward.1} parent=1 // pred_check_branch
      %24 = sbr.rel (0) target = $region13
    $region12: #{forward.1} parent=1 // pred_region
      _
    $region13: #{forward.1} parent=1 // pred_fallthru
      _
    // Predicated region
    $region14: #{forward.1} parent=1 // pred_check
      _
    $region15: #{forward.1} parent=1 // pred_check_branch
      %26 = sbr.rel (0) target = $region17
    $region16: #{forward.1} parent=1 // pred_region
      %27 = dma.done [#allocation3], 2048
    $region17: #{forward.1} parent=1 // pred_fallthru
      _
    %p28 = scmp.eq.s32.totalorder 0, 0
    // Predicated region
    $region18: #{forward.1} parent=1 // pred_check
      %p29 = pneg %p28
    $region19: #{forward.1} parent=1 // pred_check_branch
      %31 = sbr.rel (%p29) target = $region21
    $region20: #{forward.1} parent=1 // pred_region
      %32 = vst [vmem:[%s3] sm:$0xff] 0.0
      %33 = vst [vmem:[%s3 + $0x8] sm:$0xff] 0.0
    $region21: #{forward.1} parent=1 // pred_fallthru
      _
    %v34 = vld [vmem:[%s3] sm:$0xff]
    %v35 = vld [vmem:[%s3 + $0x8] sm:$0xff]
    %v36 = vld [vmem:[%s0] sm:$0xff]
    %v37 = vld [vmem:[%s0 + $0x8] sm:$0xff]
    %v38 = vld [vmem:[#allocation2] sm:$0xff]
    %v39 = vld [vmem:[#allocation2 + $0x8] sm:$0xff]
    %v40 = vld [vmem:[#allocation2 + $0x10] sm:$0xff]
    %v41 = vld [vmem:[#allocation2 + $0x18] sm:$0xff]
    %v42 = vld [vmem:[#allocation2 + $0x20] sm:$0xff]
    %v43 = vld [vmem:[#allocation2 + $0x28] sm:$0xff]
    %v44 = vld [vmem:[#allocation2 + $0x30] sm:$0xff]
    %v45 = vld [vmem:[#allocation2 + $0x38] sm:$0xff]
    %v46 = vld [vmem:[#allocation2 + $0x40] sm:$0xff]
    %v47 = vld [vmem:[#allocation2 + $0x48] sm:$0xff]
    %v48 = vld [vmem:[#allocation2 + $0x50] sm:$0xff]
    %v49 = vld [vmem:[#allocation2 + $0x58] sm:$0xff]
    %v50 = vld [vmem:[#allocation2 + $0x60] sm:$0xff]
    %v51 = vld [vmem:[#allocation2 + $0x68] sm:$0xff]
    %v52 = vld [vmem:[#allocation2 + $0x70] sm:$0xff]
    %v53 = vld [vmem:[#allocation2 + $0x78] sm:$0xff]
    %54 = vmatprep.subr.mxu0 0.0
    %55 = vmatpush1.xpose.msra.mxu0 %v53
    %56 = vmatprep.subr.mxu0 0.0
    %57 = vmatpush1.xpose.msra.mxu0 %v52
    %58 = vmatprep.subr.mxu0 0.0
    %59 = vmatpush1.xpose.msra.mxu0 %v51
    %60 = vmatprep.subr.mxu0 0.0
    %61 = vmatpush1.xpose.msra.mxu0 %v50
    %62 = vmatprep.subr.mxu0 0.0
    %63 = vmatpush1.xpose.msra.mxu0 %v49
    %64 = vmatprep.subr.mxu0 0.0
    %65 = vmatpush1.xpose.msra.mxu0 %v48
    %66 = vmatprep.subr.mxu0 0.0
    %67 = vmatpush1.xpose.msra.mxu0 %v47
    %68 = vmatprep.subr.mxu0 0.0
    %69 = vmatpush1.xpose.msra.mxu0 %v46
    %70 = vmatprep.subr.mxu0 0.0
    %71 = vmatpush1.xpose.msra.mxu0 %v45
    %72 = vmatprep.subr.mxu0 0.0
    %73 = vmatpush1.xpose.msra.mxu0 %v44
    %74 = vmatprep.subr.mxu0 0.0
    %75 = vmatpush1.xpose.msra.mxu0 %v43
    %76 = vmatprep.subr.mxu0 0.0
    %77 = vmatpush1.xpose.msra.mxu0 %v42
    %78 = vmatprep.subr.mxu0 0.0
    %79 = vmatpush1.xpose.msra.mxu0 %v41
    %80 = vmatprep.subr.mxu0 0.0
    %81 = vmatpush1.xpose.msra.mxu0 %v40
    %82 = vmatprep.subr.mxu0 0.0
    %83 = vmatpush1.xpose.msra.mxu0 %v39
    %84 = vmatprep.subr.mxu0 0.0
    %85 = vmatpush1.xpose.msra.mxu0 %v38
    %86 = vmatprep.subr.mxu0 0.0
    %87 = vmatpush2.xpose.msra.mxu0 0.0
    %88 = vmatprep.subr.mxu0 0.0
    %89 = vmatpush2.xpose.msra.mxu0 0.0
    %90 = vmatprep.subr.mxu0 0.0
    %91 = vmatpush2.xpose.msra.mxu0 0.0
    %92 = vmatprep.subr.mxu0 0.0
    %93 = vmatpush2.xpose.msra.mxu0 0.0
    %94 = vmatprep.subr.mxu0 0.0
    %95 = vmatpush2.xpose.msra.mxu0 0.0
    %96 = vmatprep.subr.mxu0 0.0
    %97 = vmatpush2.xpose.msra.mxu0 0.0
    %98 = vmatprep.subr.mxu0 0.0
    %99 = vmatpush2.xpose.msra.mxu0 0.0
    %100 = vmatprep.subr.mxu0 0.0
    %101 = vmatpush2.xpose.msra.mxu0 0.0
    %102 = vmatprep.subr.mxu0 0.0
    %103 = vmatpush2.xpose.msra.mxu0 0.0
    %104 = vmatprep.subr.mxu0 0.0
    %105 = vmatpush2.xpose.msra.mxu0 0.0
    %106 = vmatprep.subr.mxu0 0.0
    %107 = vmatpush2.xpose.msra.mxu0 0.0
    %108 = vmatprep.subr.mxu0 0.0
    %109 = vmatpush2.xpose.msra.mxu0 0.0
    %110 = vmatprep.subr.mxu0 0.0
    %111 = vmatpush2.xpose.msra.mxu0 0.0
    %112 = vmatprep.subr.mxu0 0.0
    %113 = vmatpush2.xpose.msra.mxu0 0.0
    %114 = vmatprep.subr.mxu0 0.0
    %115 = vmatpush2.xpose.msra.mxu0 0.0
    %116 = vmatprep.subr.mxu0 0.0
    %117 = vmatpush2.xpose.msra.mxu0 0.0
    %118 = vmatprep.mubr.f32.mxu0 0.0
    %119 = vmatmul.mubr.f32.gmra.mxu0 %v36
    %v120 = vpop.f32.mrf.mxu0
    %v121 = vadd.f32 0.0, %v120
    %v122 = vpop.f32.mrf.mxu0
    %123 = vmatprep.mubr.f32.mxu0 0.0
    %124 = vmatmul.mubr.f32.gmra.mxu0 %v37
    %v125 = vpop.f32.mrf.mxu0
    %v126 = vadd.f32 0.0, %v125
    %v127 = vpop.f32.mrf.mxu0
    %128 = vdwg.mxu0
    %v129 = vadd.f32 %v34, %v121
    %v130 = vadd.f32 %v35, %v126
    %131 = vst [vmem:[%s3] sm:$0xff] %v129
    %132 = vst [vmem:[%s3 + $0x8] sm:$0xff] %v130
    // Predicated region
    $region22: #{forward.1} parent=1 // pred_check
      %p133 = pneg %p28
    $region23: #{forward.1} parent=1 // pred_check_branch
      %135 = sbr.rel (%p133) target = $region25
    $region24: #{forward.1} parent=1 // pred_region
      %v136 = vld [vmem:[%s3] sm:$0xff]
      %v137 = vld [vmem:[%s3 + $0x8] sm:$0xff]
      %v138 = vld [vmem:[%s2] sm:$0x1]
      %v140 = vlaneseq
      %v141 = vshrl.u32 %v140, 7
      %v142 = vsub.s32 0, %v141
      %v143 = vrot.slane %v138, %v142
      %v145 = vadd.f32 %v136, %v143
      %v146 = vadd.f32 %v137, %v143
      %147 = vst [vmem:[%s3] sm:$0xff] %v145
      %148 = vst [vmem:[%s3 + $0x8] sm:$0xff] %v146
    $region25: #{forward.1} parent=1 // pred_fallthru
      _
    // Predicated region
    $region26: #{forward.1} parent=1 // pred_check
      _
    $region27: #{forward.1} parent=1 // pred_check_branch
      %150 = sbr.rel (0) target = $region29
    $region28: #{forward.1} parent=1 // pred_region
      _
    $region29: #{forward.1} parent=1 // pred_fallthru
      _
    // Predicated region
    $region30: #{forward.1} parent=1 // pred_check
      _
    $region31: #{forward.1} parent=1 // pred_check_branch
      %152 = sbr.rel (0) target = $region33
    $region32: #{forward.1} parent=1 // pred_region
      _
    $region33: #{forward.1} parent=1 // pred_fallthru
      _
    %153 = vsyncpa [#allocation3], 1

</llo_original>
